<compile_context>
chip_gen: v7x
topology: tpu7x:2x2x1
jax: 0.10.0
libtpu: 0.0.40
codegen_flags: <defaults>
</compile_context>

<pallas_src>
import jax
import jax.numpy as jnp
from jax.experimental import pallas as pl
from jax.experimental.pallas import tpu as pltpu


# ----------------------------------------------------------------------------
# Demonstration kernel: single HBM->HBM DMA identity copy.
# forward() itself does NOT call this (identity needs no data movement); it is
# exercised once in __main__ so the Pallas path is compiled and validated.
# ----------------------------------------------------------------------------
def _dma_identity_kernel(x_hbm_ref, o_hbm_ref, sem):
    # One DMA descriptor: src HBM -> dst HBM, no VMEM staging, no grid steps.
    cp = pltpu.make_async_copy(x_hbm_ref, o_hbm_ref, sem)
    cp.start()
    cp.wait()


@jax.jit
def pallas_identity_copy(img):
    """Materialized identity copy of `img` via a single HBM->HBM DMA."""
    return pl.pallas_call(
        _dma_identity_kernel,
        out_shape=jax.ShapeDtypeStruct(img.shape, img.dtype),
        in_specs=[pl.BlockSpec(memory_space=pl.ANY)],
        out_specs=pl.BlockSpec(memory_space=pl.ANY),
        scratch_shapes=[pltpu.SemaphoreType.DMA(())],
    )(img)


# ----------------------------------------------------------------------------
# Module-equivalent API.
# ----------------------------------------------------------------------------
def example_model_forward(img, img_metas=None, test_mode=False, **kwargs):
    """Pallas/JAX equivalent of ExampleModel.forward: returns img unchanged.

    Pure identity -> no kernel launch and no HBM round trip (the fastest
    possible implementation on any TPU generation).
    """
    return img


def train_step(data_batch, params):
    """Mirrors ExampleModel.train_step: loss = forward(**data_batch)."""
    loss = example_model_forward(**data_batch)
    return dict(loss=loss)


def init_params():
    """Deterministic parameters mirroring ExampleModel.__init__ shapes.

    nn.Conv2d(3, 3, 3): weight (3, 3, 3, 3), bias (3,). These are UNUSED by
    forward (matching the PyTorch reference) but constructed for fidelity.
    """
    key = jax.random.PRNGKey(42)
    kw, kb = jax.random.split(key)
    conv_weight = jax.random.normal(kw, (3, 3, 3, 3), dtype=jnp.float32) * 0.1
    conv_bias = jax.random.normal(kb, (3,), dtype=jnp.float32) * 0.1
    return dict(conv_weight=conv_weight, conv_bias=conv_bias, loss_lambda=0.5)


if __name__ == "__main__":
    params = init_params()  # unused in forward, as in the reference module

    # Primary small case (batch=2, C=3, 16x16 NCHW), deterministic inputs.
    key = jax.random.PRNGKey(0)
    img = jax.random.normal(key, (2, 3, 16, 16), dtype=jnp.float32)
    img_metas = [{"filename": f"img_{i}.jpg"} for i in range(img.shape[0])]

    # Forward pass: identity (no kernel launch, matching PyTorch semantics).
    out = jax.block_until_ready(
        example_model_forward(img, img_metas=img_metas, test_mode=False))
    assert out.shape == img.shape and out.dtype == img.dtype
    assert bool(jnp.array_equal(out, img))

    # Exercise the Pallas HBM->HBM DMA copy kernel once for validation.
    out_copy = jax.block_until_ready(pallas_identity_copy(img))
    assert out_copy.shape == img.shape and out_copy.dtype == img.dtype
    assert bool(jnp.array_equal(out_copy, img))

    # Larger case to exercise the DMA path on a non-trivial buffer size.
    key2 = jax.random.PRNGKey(1)
    img2 = jax.random.normal(key2, (2, 3, 128, 256), dtype=jnp.float32)
    out2 = jax.block_until_ready(pallas_identity_copy(img2))
    assert bool(jnp.array_equal(out2, img2))

    # train_step glue path.
    result = train_step(dict(img=img, img_metas=img_metas), params)
    jax.block_until_ready(result["loss"])
    assert bool(jnp.array_equal(result["loss"], img))

    print("KERNEL_OK")
</pallas_src>

<mosaic_0001>
module attributes {stable_mosaic.version = 11 : i64} {
  func.func @_dma_identity_kernel(%arg0: memref<2x3x16x16xf32, #tpu.memory_space<any>>, %arg1: memref<2x3x16x16xf32, #tpu.memory_space<any>>, %arg2: memref<!tpu.dma_semaphore, #tpu.memory_space<semaphore_mem>>) attributes {dimension_semantics = [], scalar_prefetch = 0 : i64, scratch_operands = 1 : i64, tpu.core_type = #tpu.core_type<tc>} {
    tpu.enqueue_dma source(%arg0 : memref<2x3x16x16xf32, #tpu.memory_space<any>>) target(%arg1 : memref<2x3x16x16xf32, #tpu.memory_space<any>>) target_semaphore(%arg2 : memref<!tpu.dma_semaphore, #tpu.memory_space<semaphore_mem>>)
    tpu.wait_dma2 semaphore(%arg2 : memref<!tpu.dma_semaphore, #tpu.memory_space<semaphore_mem>>) src(%arg0 : memref<2x3x16x16xf32, #tpu.memory_space<any>>) dst(%arg1 : memref<2x3x16x16xf32, #tpu.memory_space<any>>)
    return
  }
}

</mosaic_0001>

<llo_original>
// kernel: pallas_identity_copy.1
$region0: #{pallas_identity_copy.1}
  #allocation0 [shape = 'u32[]', space=smem, size = 0x4, offset = 0x4, fixed_abs, tag = 'smem constant byte address 0x4 - core index']
  #allocation1 [shape = 'u32[144,128]{1,0:T(1,128)}', space=vmem, size = 0x12000, scoped, tag = 'internal scratch']
  #allocation2 [shape = 's32[1]{0}', space=sflag, size = 0x4, scoped, tag = 'scratch operand']
  #allocation3 [shape = 's32[]', space=sflag, size = 0x4, offset = 0, fixed_abs, tag = 'sflag constant byte address 0x0 - dummy sync flag']
  #allocation4 [shape = 'u32[0]{0}', space=smem, size = 0, offset = 0, fixed_abs, tag = 'smem constant byte address 0x0 - null']
  %s0 = inlined_call_operand.hbm [shape: f32[2,3,16,16], index: 0, kind: input, shape index: {}]
  %s1 = inlined_call_operand.hbm [shape: f32[2,3,16,16], index: 1, kind: output, shape index: {}]
  %s2 = sld [smem:[#allocation0]]
  $region2: #{pallas_identity_copy.1} parent=0
    _
  %s4 = ssub.s32 1, %s2
  %s5 = scalar_select 0, %s4, %s2
  %s7 = sshll.u32 1, 14
  %s8 = sxor.u32 4294967295, %s7
  %s11 = sshll.u32 3, 24
  %s12 = sxor.u32 4294967295, %s11
  %s13 = sand.u32 0, %s12
  %s15 = sor.u32 %s13, 0
  %18 = dma.general %s0, 1536, %s1, [#allocation2], [#allocation3], [#allocation4], %s15, 0
  %s19 = smul.u32 2, 3
  %s20 = smul.u32 %s19, 16
  %s21 = smul.u32 %s20, 1
  %s22 = sshll.u32 %s21, 4
  %23 = dma.done [#allocation2], %s22
  %24 = vsyncmov [#allocation2]
  %s25 = vpop.sfrf %24
  %p26 = scmp.eq.s32.totalorder %s25, 0
  %p27 = pneg %p26
  %29 = shalt.err (%p27)

</llo_original>
